<compile_context>
chip_gen: v7x
topology: tpu7x:2x2x1
jax: 0.10.0
libtpu: 0.0.40
codegen_flags: <defaults>
</compile_context>

<pallas_src>
import functools

import numpy as np
import jax
import jax.numpy as jnp
from jax.experimental import pallas as pl
from jax.experimental.pallas import tpu as pltpu

_VMEM_LIMIT = 32 * 1024 * 1024


# ---------------------------------------------------------------------------
# Pallas kernels
# ---------------------------------------------------------------------------

def _conv1x1_kernel(x_ref, w_ref, b_ref, o_ref):
    # x: (bm, Cin), w: (Cin, Cout), b: (1, Cout), o: (bm, Cout)
    y = jnp.dot(x_ref[...], w_ref[...], preferred_element_type=jnp.float32)
    o_ref[...] = (y + b_ref[...]).astype(o_ref.dtype)


def _lateral_topdown_kernel(x_ref, w_ref, b_ref, td_ref, g_ref, o_ref):
    # Fused: 1x1 lateral conv + 2x-nearest upsample of the coarse top-down map
    # (done as a constant 0/1 expansion matmul on the MXU) + add + bias.
    # x: (1, bm, Cin), w: (Cin, C), b: (1, C), td: (1, bm//4, C), g: (bm, bm//4)
    lat = jnp.dot(x_ref[0], w_ref[...], preferred_element_type=jnp.float32)
    up = jnp.dot(g_ref[...], td_ref[0], preferred_element_type=jnp.float32)
    o_ref[0] = (lat + up + b_ref[...]).astype(o_ref.dtype)


def _conv3x3_kernel(x_ref, w_ref, b_ref, s_ref, o_ref, *, wp, th):
    # x: (1, (th+3)*wp, Cin)  flattened haloed row-band slab (padded width wp)
    # w: (9*Cin, Cout), b: (1, Cout)
    # s: (th*W, th*wp)  constant 0/1 selector dropping the padded-width columns
    # o: (1, th*W, Cout)
    n_rows = th * wp
    taps = [x_ref[0, pl.ds(dy * wp + dx, n_rows), :]
            for dy in range(3) for dx in range(3)]
    patch = jnp.concatenate(taps, axis=-1)                    # (th*wp, 9*Cin)
    y = jnp.dot(patch, w_ref[...], preferred_element_type=jnp.float32)
    out = jnp.dot(s_ref[...], y, preferred_element_type=jnp.float32) + b_ref[...]
    o_ref[0] = out.astype(o_ref.dtype)


# ---------------------------------------------------------------------------
# Wrappers (layout glue stays in plain JAX; all reshapes here are metadata-only)
# ---------------------------------------------------------------------------

def _largest_divisor_leq(n, cap):
    cap = max(1, min(n, cap))
    for d in range(cap, 0, -1):
        if n % d == 0:
            return d
    return 1


def conv1x1(x_nhwc, w, b, *, bm_target=512):
    """Plain 1x1 conv (used only for the deepest / smallest level)."""
    n, h, wd, cin = x_nhwc.shape
    cout = w.shape[1]
    m = n * h * wd
    x2 = x_nhwc.reshape(m, cin)
    if m <= bm_target:
        bm, mp = m, m
    else:
        bm = bm_target
        mp = pl.cdiv(m, bm) * bm
        if mp != m:
            x2 = jnp.pad(x2, ((0, mp - m), (0, 0)))
    out = pl.pallas_call(
        _conv1x1_kernel,
        out_shape=jax.ShapeDtypeStruct((mp, cout), x_nhwc.dtype),
        grid=(mp // bm,),
        in_specs=[pl.BlockSpec((bm, cin), lambda i: (i, 0)),
                  pl.BlockSpec((cin, cout), lambda i: (0, 0)),
                  pl.BlockSpec((1, cout), lambda i: (0, 0))],
        out_specs=pl.BlockSpec((bm, cout), lambda i: (i, 0)),
        compiler_params=pltpu.CompilerParams(
            dimension_semantics=("parallel",), vmem_limit_bytes=_VMEM_LIMIT),
    )(x2, w, b.reshape(1, cout))
    if mp != m:
        out = out[:m]
    return out.reshape(n, h, wd, cout)


def conv1x1_topdown(x_nhwc, w, b, td_nhwc, *, row_target=512):
    """Fused: 1x1 lateral conv + 2x nearest upsample of td (half-res) + add."""
    n, h, wd, cin = x_nhwc.shape
    cout = w.shape[1]
    n2, h2, w2, c2 = td_nhwc.shape
    assert n2 == n and h == 2 * h2 and wd == 2 * w2 and c2 == cout, \
        "top-down map must be exactly half resolution"

    # even divisor of h so each row block maps to whole coarse rows
    th = 2
    for d in range(2, h + 1, 2):
        if h % d == 0 and d * wd <= row_target:
            th = d
    nb = h // th
    bm = th * wd                     # fine pixels per block
    bmc = (th // 2) * w2             # coarse pixels per block

    x3 = x_nhwc.reshape(n * nb, bm, cin)
    td3 = td_nhwc.reshape(n * nb, bmc, cout)

    # constant nearest-neighbour expansion matrix (exactly one 1.0 per row)
    p = np.arange(bm)
    dh, dw = p // wd, p % wd
    q = (dh // 2) * w2 + (dw // 2)
    g = np.zeros((bm, bmc), np.float32)
    g[p, q] = 1.0

    out = pl.pallas_call(
        _lateral_topdown_kernel,
        out_shape=jax.ShapeDtypeStruct((n * nb, bm, cout), x_nhwc.dtype),
        grid=(n * nb,),
        in_specs=[pl.BlockSpec((1, bm, cin), lambda i: (i, 0, 0)),
                  pl.BlockSpec((cin, cout), lambda i: (0, 0)),
                  pl.BlockSpec((1, cout), lambda i: (0, 0)),
                  pl.BlockSpec((1, bmc, cout), lambda i: (i, 0, 0)),
                  pl.BlockSpec((bm, bmc), lambda i: (0, 0))],
        out_specs=pl.BlockSpec((1, bm, cout), lambda i: (i, 0, 0)),
        compiler_params=pltpu.CompilerParams(
            dimension_semantics=("parallel",), vmem_limit_bytes=_VMEM_LIMIT),
    )(x3, w, b.reshape(1, cout), td3, jnp.asarray(g))
    return out.reshape(n, h, wd, cout)


def conv3x3_same(x_nhwc, w_hwio, b, *, px_target=1024,
                 patch_budget=8 * 1024 * 1024):
    """3x3 conv, stride 1, padding 1, as a single fused K=9*Cin MXU contraction
    per haloed row band (no 9x im2col in HBM)."""
    n, h, wd, cin = x_nhwc.shape
    cout = w_hwio.shape[-1]
    wp = wd + 2

    # rows per band: divisor of h, capped by pixel target and patch VMEM budget
    bytes_per_patch_row = wp * 9 * cin * 4
    th_cap = min(max(1, px_target // wp),
                 max(1, patch_budget // bytes_per_patch_row))
    th = _largest_divisor_leq(h, th_cap)
    nh = h // th
    slab_rows = (th + 3) * wp    # th + 2 halo rows + 1 slack row for tap shifts

    # zero pad: 1 top, 2 bottom (halo + shift slack), 1 left, 1 right
    xp = jnp.pad(x_nhwc, ((0, 0), (1, 2), (1, 1), (0, 0)))
    bands = jnp.stack([xp[:, i * th: i * th + th + 3] for i in range(nh)], axis=1)
    slabs = bands.reshape(n * nh, slab_rows, cin)

    w9 = w_hwio.reshape(9 * cin, cout)          # (dy, dx, ci) row-major
    b2 = b.reshape(1, cout)

    # constant selector: output flat (h_rel*wd + w)  <-  slab flat (h_rel*wp + w)
    rows = np.arange(th * wd)
    hr, wc = rows // wd, rows % wd
    s = np.zeros((th * wd, th * wp), np.float32)
    s[rows, hr * wp + wc] = 1.0

    out = pl.pallas_call(
        functools.partial(_conv3x3_kernel, wp=wp, th=th),
        out_shape=jax.ShapeDtypeStruct((n * nh, th * wd, cout), x_nhwc.dtype),
        grid=(n * nh,),
        in_specs=[pl.BlockSpec((1, slab_rows, cin), lambda i: (i, 0, 0)),
                  pl.BlockSpec((9 * cin, cout), lambda i: (0, 0)),
                  pl.BlockSpec((1, cout), lambda i: (0, 0)),
                  pl.BlockSpec((th * wd, th * wp), lambda i: (0, 0))],
        out_specs=pl.BlockSpec((1, th * wd, cout), lambda i: (i, 0, 0)),
        compiler_params=pltpu.CompilerParams(
            dimension_semantics=("parallel",), vmem_limit_bytes=_VMEM_LIMIT),
    )(slabs, w9, b2, jnp.asarray(s))
    return out.reshape(n, nh, th, wd, cout).reshape(n, h, wd, cout)


# ---------------------------------------------------------------------------
# FPN module
# ---------------------------------------------------------------------------

def init_fpn_params(key, in_channels_list, out_channels):
    params = []
    for cin in in_channels_list:
        key, k1, k2, k3, k4 = jax.random.split(key, 5)
        params.append(dict(
            inner_w=0.1 * jax.random.normal(k1, (cin, out_channels), jnp.float32),
            inner_b=0.1 * jax.random.normal(k2, (out_channels,), jnp.float32),
            layer_w=0.1 * jax.random.normal(
                k3, (3, 3, out_channels, out_channels), jnp.float32),  # HWIO
            layer_b=0.1 * jax.random.normal(k4, (out_channels,), jnp.float32),
        ))
    return params


def fpn_forward_nhwc(params, xs_nhwc):
    """Fast path: NHWC in / NHWC out, no layout transposes."""
    last_inner = conv1x1(xs_nhwc[-1], params[-1]["inner_w"], params[-1]["inner_b"])
    results = [conv3x3_same(last_inner, params[-1]["layer_w"], params[-1]["layer_b"])]
    for feature, p in zip(xs_nhwc[:-1][::-1], params[:-1][::-1]):
        # lateral 1x1 conv + 2x nearest upsample of last_inner + add: one kernel
        last_inner = conv1x1_topdown(feature, p["inner_w"], p["inner_b"], last_inner)
        results.insert(0, conv3x3_same(last_inner, p["layer_w"], p["layer_b"]))
    # TODO(synk): top_blocks is None in this configuration (no extra pooled level).
    return tuple(results)


def fpn_forward(params, xs_nchw):
    """PyTorch-parity wrapper (NCHW in / NCHW out).  The transposes are plain XLA
    glue; prefer fpn_forward_nhwc end-to-end to avoid the extra HBM passes."""
    xs = [jnp.transpose(x, (0, 2, 3, 1)) for x in xs_nchw]
    outs = fpn_forward_nhwc(params, xs)
    return tuple(jnp.transpose(r, (0, 3, 1, 2)) for r in outs)


# ---------------------------------------------------------------------------
# Pure-JAX reference (correctness check)
# ---------------------------------------------------------------------------

def _ref_fpn(params, xs_nchw):
    def conv2d(x, w_oihw, b, padding):
        y = jax.lax.conv_general_dilated(
            x, w_oihw, (1, 1), padding,
            dimension_numbers=("NCHW", "OIHW", "NCHW"))
        return y + b.reshape(1, -1, 1, 1)

    def inner(x, p):
        cin, cout = p["inner_w"].shape
        w = p["inner_w"].T.reshape(cout, cin, 1, 1)
        return conv2d(x, w, p["inner_b"], "VALID")

    def layer(x, p):
        w = jnp.transpose(p["layer_w"], (3, 2, 0, 1))  # HWIO -> OIHW
        return conv2d(x, w, p["layer_b"], [(1, 1), (1, 1)])

    last_inner = inner(xs_nchw[-1], params[-1])
    results = [layer(last_inner, params[-1])]
    for x, p in zip(xs_nchw[:-1][::-1], params[:-1][::-1]):
        up = jnp.repeat(jnp.repeat(last_inner, 2, axis=2), 2, axis=3)
        last_inner = inner(x, p) + up
        results.insert(0, layer(last_inner, p))
    return tuple(results)


# ---------------------------------------------------------------------------

if __name__ == "__main__":
    key = jax.random.PRNGKey(0)
    in_channels_list = [4, 8, 16]
    out_channels = 8
    batch = 2
    spatials = [16, 8, 4]

    key, pkey = jax.random.split(key)
    params = init_fpn_params(pkey, in_channels_list, out_channels)

    xs = []
    for cin, s in zip(in_channels_list, spatials):
        key, xkey = jax.random.split(key)
        xs.append(jax.random.normal(xkey, (batch, cin, s, s), jnp.float32))

    outs = fpn_forward(params, xs)
    outs = jax.block_until_ready(outs)

    refs = _ref_fpn(params, xs)
    for o, r in zip(outs, refs):
        assert o.shape == r.shape, (o.shape, r.shape)
        assert jnp.allclose(o, r, atol=1e-4, rtol=1e-4), "mismatch vs reference"

    print("KERNEL_OK")
</pallas_src>

<mosaic_0001>
module attributes {stable_mosaic.version = 11 : i64} {
  func.func @_conv1x1_kernel(%arg0: i32, %arg1: memref<32x16xf32, #tpu.memory_space<vmem>>, %arg2: memref<16x8xf32, #tpu.memory_space<vmem>>, %arg3: memref<1x8xf32, #tpu.memory_space<vmem>>, %arg4: memref<32x8xf32, #tpu.memory_space<vmem>>) attributes {dimension_semantics = [#tpu.dimension_semantics<parallel>], iteration_bounds = array<i64: 1>, scalar_prefetch = 0 : i64, scratch_operands = 0 : i64, tpu.core_type = #tpu.core_type<tc>, window_params = [{transform_indices = @transform_0, window_bounds = array<i64: 32, 16>}, {pipeline_mode = #tpu.pipeline_mode<synchronous>, transform_indices = @transform_1, window_bounds = array<i64: 16, 8>}, {pipeline_mode = #tpu.pipeline_mode<synchronous>, transform_indices = @transform_2, window_bounds = array<i64: 1, 8>}, {transform_indices = @transform_3, window_bounds = array<i64: 32, 8>}]} {
    %c0 = arith.constant 0 : index
    %c0_0 = arith.constant 0 : index
    %0 = vector.load %arg1[%c0, %c0_0] : memref<32x16xf32, #tpu.memory_space<vmem>>, vector<32x16xf32>
    %c0_1 = arith.constant 0 : index
    %c0_2 = arith.constant 0 : index
    %1 = vector.load %arg2[%c0_1, %c0_2] : memref<16x8xf32, #tpu.memory_space<vmem>>, vector<16x8xf32>
    %cst = arith.constant dense<0.000000e+00> : vector<32x8xf32>
    %2 = tpu.matmul %0, %1, %cst {dimension_numbers = #tpu.dot_dimension_numbers<[1], [0], [0], [1], [0, 0, 1, 1], [], []>} : vector<32x16xf32>, vector<16x8xf32>, vector<32x8xf32> -> vector<32x8xf32>
    %c0_3 = arith.constant 0 : index
    %c0_4 = arith.constant 0 : index
    %3 = vector.load %arg3[%c0_3, %c0_4] : memref<1x8xf32, #tpu.memory_space<vmem>>, vector<1x8xf32>
    %4 = vector.broadcast %3 : vector<1x8xf32> to vector<32x8xf32>
    %5 = arith.addf %2, %4 : vector<32x8xf32>
    %c0_5 = arith.constant 0 : index
    %c0_6 = arith.constant 0 : index
    %6 = vector.load %arg4[%c0_5, %c0_6] : memref<32x8xf32, #tpu.memory_space<vmem>>, vector<32x8xf32>
    tpu.vector_store %arg4[%c0_5, %c0_6], %5 {strides = array<i32>} : memref<32x8xf32, #tpu.memory_space<vmem>>, vector<32x8xf32>,
    return
  }
  func.func @transform_0(%arg0: i32) -> (i32, i32) {
    %c0_i32 = arith.constant 0 : i32
    %c0_i32_0 = arith.constant 0 : i32
    return %arg0, %c0_i32 : i32, i32
  }
  func.func @transform_1(%arg0: i32) -> (i32, i32) {
    %c0_i32 = arith.constant 0 : i32
    %c0_i32_0 = arith.constant 0 : i32
    %c0_i32_1 = arith.constant 0 : i32
    return %c0_i32, %c0_i32_0 : i32, i32
  }
  func.func @transform_2(%arg0: i32) -> (i32, i32) {
    %c0_i32 = arith.constant 0 : i32
    %c0_i32_0 = arith.constant 0 : i32
    %c0_i32_1 = arith.constant 0 : i32
    return %c0_i32, %c0_i32_0 : i32, i32
  }
  func.func @transform_3(%arg0: i32) -> (i32, i32) {
    %c0_i32 = arith.constant 0 : i32
    %c0_i32_0 = arith.constant 0 : i32
    return %arg0, %c0_i32 : i32, i32
  }
}

</mosaic_0001>

<llo_original>
// kernel: tpu_custom_call.1
$region0: #{tpu_custom_call.1}
  #allocation0 [shape = 'u32[]', space=smem, size = 0x4, offset = 0x4, fixed_abs, tag = 'smem constant byte address 0x4 - core index']
  #allocation1 [shape = 'u32[144,128]{1,0:T(1,128)}', space=vmem, size = 0x12000, scoped, tag = 'internal scratch']
  %s0 = inlined_call_operand.vmem [shape: f32[32,16], index: 0, kind: input, shape index: {}]
  %s1 = inlined_call_operand.vmem [shape: f32[16,8], index: 1, kind: input, shape index: {}]
  %s2 = inlined_call_operand.vmem [shape: f32[1,8], index: 2, kind: input, shape index: {}]
  %s3 = inlined_call_operand.vmem [shape: f32[32,8], index: 3, kind: output, shape index: {}]
  %s4 = sld [smem:[#allocation0]]
  $region22: #{tpu_custom_call.1} parent=0
    _
  %s6 = ssub.s32 1, %s4
  %s7 = scalar_select 0, %s6, %s4
  // Predicated region
  $region2: #{tpu_custom_call.1} parent=0 // pred_check
    _
  $region3: #{tpu_custom_call.1} parent=0 // pred_check_branch
    %9 = sbr.rel (0) target = $region5
  $region4: #{tpu_custom_call.1} parent=0 // pred_region
    _
  $region5: #{tpu_custom_call.1} parent=0 // pred_fallthru
    _
  // Predicated region
  $region6: #{tpu_custom_call.1} parent=0 // pred_check
    _
  $region7: #{tpu_custom_call.1} parent=0 // pred_check_branch
    %11 = sbr.rel (0) target = $region9
  $region8: #{tpu_custom_call.1} parent=0 // pred_region
    _
  $region9: #{tpu_custom_call.1} parent=0 // pred_fallthru
    _
  // Predicated region
  $region10: #{tpu_custom_call.1} parent=0 // pred_check
    _
  $region11: #{tpu_custom_call.1} parent=0 // pred_check_branch
    %13 = sbr.rel (0) target = $region13
  $region12: #{tpu_custom_call.1} parent=0 // pred_region
    _
  $region13: #{tpu_custom_call.1} parent=0 // pred_fallthru
    _
  %v14 = vld [vmem:[%s0] sm:$0xff]
  %v15 = vld [vmem:[%s0 + $0x8] sm:$0xff]
  %v16 = vld [vmem:[%s0 + $0x10] sm:$0xff]
  %v17 = vld [vmem:[%s0 + $0x18] sm:$0xff]
  %v18 = vld [vmem:[%s1] sm:$0xff]
  %v19 = vld [vmem:[%s1 + $0x8] sm:$0xff]
  %v20 = vld [vmem:[%s2] sm:$0x1]
  %v22 = vlaneseq
  %v23 = vshrl.u32 %v22, 7
  %v24 = vsub.s32 0, %v23
  %v25 = vrot.slane %v20, %v24
  %vm27 = vcmask 130048
  %v29 = vsel %vm27, %v14, 0
  %v32 = vsel %vm27, %v15, 0
  %v35 = vsel %vm27, %v16, 0
  %v38 = vsel %vm27, %v17, 0
  %40 = vmatprep.subr.mxu0 0.0
  %41 = vmatpush1.msra.mxu0 %v18
  %42 = vmatprep.subr.mxu0 0.0
  %43 = vmatpush1.msra.mxu0 %v19
  %44 = vmatprep.subr.mxu0 0.0
  %45 = vmatpush1.msra.mxu0 0.0
  %46 = vmatprep.subr.mxu0 0.0
  %47 = vmatpush1.msra.mxu0 0.0
  %48 = vmatprep.subr.mxu0 0.0
  %49 = vmatpush1.msra.mxu0 0.0
  %50 = vmatprep.subr.mxu0 0.0
  %51 = vmatpush1.msra.mxu0 0.0
  %52 = vmatprep.subr.mxu0 0.0
  %53 = vmatpush1.msra.mxu0 0.0
  %54 = vmatprep.subr.mxu0 0.0
  %55 = vmatpush1.msra.mxu0 0.0
  %56 = vmatprep.subr.mxu0 0.0
  %57 = vmatpush1.msra.mxu0 0.0
  %58 = vmatprep.subr.mxu0 0.0
  %59 = vmatpush1.msra.mxu0 0.0
  %60 = vmatprep.subr.mxu0 0.0
  %61 = vmatpush1.msra.mxu0 0.0
  %62 = vmatprep.subr.mxu0 0.0
  %63 = vmatpush1.msra.mxu0 0.0
  %64 = vmatprep.subr.mxu0 0.0
  %65 = vmatpush1.msra.mxu0 0.0
  %66 = vmatprep.subr.mxu0 0.0
  %67 = vmatpush1.msra.mxu0 0.0
  %68 = vmatprep.subr.mxu0 0.0
  %69 = vmatpush1.msra.mxu0 0.0
  %70 = vmatprep.subr.mxu0 0.0
  %71 = vmatpush1.msra.mxu0 0.0
  %72 = vmatprep.subr.mxu0 0.0
  %73 = vmatpush1.msra.mxu0 0.0
  %74 = vmatprep.subr.mxu0 0.0
  %75 = vmatpush1.msra.mxu0 0.0
  %76 = vmatprep.subr.mxu0 0.0
  %77 = vmatpush1.msra.mxu0 0.0
  %78 = vmatprep.subr.mxu0 0.0
  %79 = vmatpush1.msra.mxu0 0.0
  %80 = vmatprep.subr.mxu0 0.0
  %81 = vmatpush1.msra.mxu0 0.0
  %82 = vmatprep.subr.mxu0 0.0
  %83 = vmatpush1.msra.mxu0 0.0
  %84 = vmatprep.subr.mxu0 0.0
  %85 = vmatpush1.msra.mxu0 0.0
  %86 = vmatprep.subr.mxu0 0.0
  %87 = vmatpush1.msra.mxu0 0.0
  %88 = vmatprep.subr.mxu0 0.0
  %89 = vmatpush1.msra.mxu0 0.0
  %90 = vmatprep.subr.mxu0 0.0
  %91 = vmatpush1.msra.mxu0 0.0
  %92 = vmatprep.subr.mxu0 0.0
  %93 = vmatpush1.msra.mxu0 0.0
  %94 = vmatprep.subr.mxu0 0.0
  %95 = vmatpush1.msra.mxu0 0.0
  %96 = vmatprep.subr.mxu0 0.0
  %97 = vmatpush1.msra.mxu0 0.0
  %98 = vmatprep.subr.mxu0 0.0
  %99 = vmatpush1.msra.mxu0 0.0
  %100 = vmatprep.subr.mxu0 0.0
  %101 = vmatpush1.msra.mxu0 0.0
  %102 = vmatprep.subr.mxu0 0.0
  %103 = vmatpush1.msra.mxu0 0.0
  %104 = vmatprep.mubr.f32.mxu0 0.0
  %105 = vmatmul.mubr.f32.gmra.mrb[0].mxu0 %v29
  %v106 = vpop.f32.mrb[0].mxu0
  %v107 = vadd.f32 %v25, %v106
  %v108 = vpop.f32.mrb[0].mxu0
  %109 = vmatprep.mubr.f32.mxu0 0.0
  %110 = vmatmul.mubr.f32.gmra.mrb[0].mxu0 %v32
  %v111 = vpop.f32.mrb[0].mxu0
  %v112 = vadd.f32 %v25, %v111
  %v113 = vpop.f32.mrb[0].mxu0
  %114 = vmatprep.mubr.f32.mxu0 0.0
  %115 = vmatmul.mubr.f32.gmra.mrb[0].mxu0 %v35
  %v116 = vpop.f32.mrb[0].mxu0
  %v117 = vadd.f32 %v25, %v116
  %v118 = vpop.f32.mrb[0].mxu0
  %119 = vmatprep.mubr.f32.mxu0 0.0
  %120 = vmatmul.mubr.f32.gmra.mrb[0].mxu0 %v38
  %v121 = vpop.f32.mrb[0].mxu0
  %v122 = vadd.f32 %v25, %v121
  %v123 = vpop.f32.mrb[0].mxu0
  %124 = vdwg.mxu0
  %vm125 = vcmask 64512
  %126 = vst.msk [vmem:[%s3] sm:$0xff] %vm125, %v107
  %127 = vst.msk [vmem:[%s3 + $0x8] sm:$0xff] %vm125, %v112
  %128 = vst.msk [vmem:[%s3 + $0x10] sm:$0xff] %vm125, %v117
  %129 = vst.msk [vmem:[%s3 + $0x18] sm:$0xff] %vm125, %v122
  // Predicated region
  $region14: #{tpu_custom_call.1} parent=0 // pred_check
    _
  $region15: #{tpu_custom_call.1} parent=0 // pred_check_branch
    %131 = sbr.rel (0) target = $region17
  $region16: #{tpu_custom_call.1} parent=0 // pred_region
    _
  $region17: #{tpu_custom_call.1} parent=0 // pred_fallthru
    _
  // Predicated region
  $region18: #{tpu_custom_call.1} parent=0 // pred_check
    _
  $region19: #{tpu_custom_call.1} parent=0 // pred_check_branch
    %133 = sbr.rel (0) target = $region21
  $region20: #{tpu_custom_call.1} parent=0 // pred_region
    _
  $region21: #{tpu_custom_call.1} parent=0 // pred_fallthru
    _

</llo_original>
